<compile_context>
chip_gen: v7x
topology: tpu7x:2x2x1
jax: 0.10.0
libtpu: 0.0.40
codegen_flags: <defaults>
</compile_context>

<pallas_src>
import functools

import jax
import jax.numpy as jnp
from jax.experimental import pallas as pl
from jax.experimental.pallas import tpu as pltpu


def _round_up(n, m):
    return (n + m - 1) // m * m


def _double_conv_kernel(x_ref, w1_ref, w2_ref, o_ref, *, W, M, M1):
    # x_ref : (Cin, M + XPAD) bf16 — batch-folded NCHW activations; lane index
    #         = n*H*W + h*W + w; tail zero-padded in the wrapper so every tap
    #         slice below stays in bounds (no in-kernel pad concat / scratch).
    # w1_ref: (Cmid, K1p) bf16 — conv1 weights, col = (kh*3 + kw)*Cin + cin,
    #         K padded to a multiple of 16.
    # w2_ref: (Cout, K2p) bf16 — conv2 weights, same layout over Cmid.
    # o_ref : (Cout, M)   f32  — "wide" DoubleConv output; wrapper crops.
    Cin = x_ref.shape[0]
    Cmid, K1p = w1_ref.shape
    Cout, K2p = w2_ref.shape

    def im2col(a, c, kp, m):
        # a: (c, >= m + 2*W + 2) bf16. Hoist the kw lane shifts: 3 shifted
        # views, then the 9 taps are kh*W offsets of those views (aligned
        # slices whenever W % 128 == 0). Rows ordered (kh*3 + kw)*c + ci to
        # match the flattened weights.
        cols = [a[:, kw:kw + m + 2 * W] for kw in range(3)]
        taps = [cols[kw][:, kh * W:kh * W + m]
                for kh in range(3) for kw in range(3)]
        if kp > 9 * c:
            taps.append(jnp.zeros((kp - 9 * c, m), jnp.bfloat16))
        return jnp.concatenate(taps, axis=0)               # (kp, m) bf16

    x = x_ref[...]                                          # one (Cin, M+XPAD) load

    # ---- Conv1 (3x3 valid, no bias) + ReLU: one fused-K MXU matmul.
    # Computed over M1 > M "extra-wide" columns so conv2's taps can slice h1
    # directly; the extra columns only feed outputs that the wrapper crops.
    h1 = jnp.dot(w1_ref[...], im2col(x, Cin, K1p, M1),
                 preferred_element_type=jnp.float32)        # (Cmid, M1) f32
    h1 = jnp.maximum(h1, 0.0).astype(jnp.bfloat16)          # fused ReLU + downcast

    # ---- Conv2 (3x3 valid, no bias) + ReLU.
    out = jnp.dot(w2_ref[...], im2col(h1, Cmid, K2p, M),
                  preferred_element_type=jnp.float32)       # (Cout, M) f32
    o_ref[...] = jnp.maximum(out, 0.0).astype(o_ref.dtype)  # single lane-dense store


def _flatten_weight(w_oihw):
    """OIHW (Co, Ci, 3, 3) -> (Co, pad16(9*Ci)) bf16, col = (kh*3 + kw)*Ci + ci."""
    Co, Ci, KH, KW = w_oihw.shape
    k = KH * KW * Ci
    wf = jnp.transpose(w_oihw, (0, 2, 3, 1)).reshape(Co, k)
    kp = _round_up(k, 16)          # bf16 packs 2 rows/sublane -> (16,128) tile
    if kp > k:
        wf = jnp.pad(wf, ((0, 0), (0, kp - k)))
    return wf.astype(jnp.bfloat16)


@jax.jit
def double_conv(x_nchw, w1_oihw, w2_oihw):
    """DoubleConv forward. x_nchw: (N, Cin, H, W); weights PyTorch OIHW, no bias."""
    N, Cin, H, W = x_nchw.shape
    Cmid = w1_oihw.shape[0]
    Cout = w2_oihw.shape[0]

    # Wide-conv contract: exactly two stacked 3x3 VALID convs => crop margin 4.
    # Changing kernel size / stride / padding / number of convs invalidates it.
    assert w1_oihw.shape[1:] == (Cin, 3, 3), w1_oihw.shape
    assert w2_oihw.shape[1:] == (Cmid, 3, 3), w2_oihw.shape
    assert H >= 5 and W >= 5, (H, W)

    HW = H * W
    M = N * HW
    PAD1 = _round_up(2 * W + 2, 128)            # conv1 wide tail needed by conv2 taps
    M1 = M + PAD1
    XPAD = _round_up(PAD1 + 2 * W + 2, 128)     # input tail so all tap slices stay in bounds

    # Batch-fold + pad + bf16 cast in the wrapper (cheap XLA HBM ops), so the
    # kernel itself is copy-free. Lane index of the slab = n*H*W + h*W + w.
    x_fold = jnp.transpose(x_nchw, (1, 0, 2, 3)).reshape(Cin, M)
    x_fold = jnp.pad(x_fold, ((0, 0), (0, XPAD))).astype(jnp.bfloat16)

    w1f = _flatten_weight(w1_oihw)              # (Cmid, pad16(9*Cin))  bf16
    w2f = _flatten_weight(w2_oihw)              # (Cout, pad16(9*Cmid)) bf16
    K1p = w1f.shape[1]
    K2p = w2f.shape[1]

    # Working-set estimate (double-buffered blocks + im2col/matmul temporaries);
    # default scoped VMEM limit is only 16/32 MiB on v5e/v6e.
    est_bytes = (
        2 * 2 * Cin * (M + XPAD)                    # x block (bf16, x2 buffers)
        + 2 * 2 * (Cmid * K1p + Cout * K2p)         # weight blocks
        + 2 * 4 * Cout * M                          # f32 output block (x2 buffers)
        + 2 * (K1p + Cmid) * M1                     # conv1 im2col + h1 (bf16)
        + 2 * K2p * M                               # conv2 im2col (bf16)
        + 4 * (Cmid * M1 + Cout * M))               # f32 matmul results pre-ReLU
    vmem_limit = int(min(64 * 1024 * 1024, max(32 * 1024 * 1024, 6 * est_bytes)))

    kernel = functools.partial(_double_conv_kernel, W=W, M=M, M1=M1)
    out_wide = pl.pallas_call(
        kernel,
        out_shape=jax.ShapeDtypeStruct((Cout, M), x_nchw.dtype),
        grid_spec=pltpu.PrefetchScalarGridSpec(
            num_scalar_prefetch=0,
            grid=(1,),                              # whole (small) batch in one step
            in_specs=[
                pl.BlockSpec(x_fold.shape, lambda i: (0, 0)),
                pl.BlockSpec(w1f.shape, lambda i: (0, 0)),
                pl.BlockSpec(w2f.shape, lambda i: (0, 0)),
            ],
            out_specs=pl.BlockSpec((Cout, M), lambda i: (0, 0)),
        ),
        compiler_params=pltpu.CompilerParams(
            dimension_semantics=("arbitrary",),
            vmem_limit_bytes=vmem_limit),
    )(x_fold, w1f, w2f)

    # Un-fold + crop the "wide" columns -> valid double-3x3 output (N, Cout, H-4, W-4).
    out = out_wide.reshape(Cout, N, H, W).transpose(1, 0, 2, 3)
    return out[:, :, :H - 4, :W - 4]


def _reference_double_conv(x_nchw, w1_oihw, w2_oihw):
    """Pure-JAX reference (matches torch Conv2d(..., padding=0, bias=False))."""
    dn = jax.lax.conv_dimension_numbers(x_nchw.shape, w1_oihw.shape,
                                        ("NCHW", "OIHW", "NCHW"))
    h = jax.lax.conv_general_dilated(x_nchw, w1_oihw, (1, 1), "VALID",
                                     dimension_numbers=dn)
    h = jnp.maximum(h, 0.0)
    dn2 = jax.lax.conv_dimension_numbers(h.shape, w2_oihw.shape,
                                         ("NCHW", "OIHW", "NCHW"))
    o = jax.lax.conv_general_dilated(h, w2_oihw, (1, 1), "VALID",
                                     dimension_numbers=dn2)
    return jnp.maximum(o, 0.0)


if __name__ == "__main__":
    # Small shapes consistent with the module: in_channels=4, out_channels=8
    # (mid_channels defaults to out_channels), batch=2, spatial=16.
    N, Cin, H, W = 2, 4, 16, 16
    Cmid = Cout = 8

    key = jax.random.PRNGKey(0)
    kx, k1, k2 = jax.random.split(key, 3)
    x = jax.random.normal(kx, (N, Cin, H, W), dtype=jnp.float32)
    # Deterministic synthetic weights (PyTorch OIHW layout, no bias).
    w1 = jax.random.normal(k1, (Cmid, Cin, 3, 3), dtype=jnp.float32) * 0.1
    w2 = jax.random.normal(k2, (Cout, Cmid, 3, 3), dtype=jnp.float32) * 0.1

    out = jax.block_until_ready(double_conv(x, w1, w2))
    ref = jax.block_until_ready(_reference_double_conv(x, w1, w2))

    assert out.shape == (N, Cout, H - 4, W - 4), out.shape
    # Precision contract: bf16 MXU operands with f32 accumulation.
    assert jnp.allclose(out, ref, atol=3e-2, rtol=3e-2), \
        float(jnp.max(jnp.abs(out - ref)))

    print("KERNEL_OK")
</pallas_src>

<mosaic_0001>
module attributes {stable_mosaic.version = 11 : i64} {
  func.func @_double_conv_kernel(%arg0: i32, %arg1: memref<4x768xbf16, #tpu.memory_space<vmem>>, %arg2: memref<8x48xbf16, #tpu.memory_space<vmem>>, %arg3: memref<8x80xbf16, #tpu.memory_space<vmem>>, %arg4: memref<8x512xf32, #tpu.memory_space<vmem>>) attributes {dimension_semantics = [#tpu.dimension_semantics<arbitrary>], iteration_bounds = array<i64: 1>, scalar_prefetch = 0 : i64, scratch_operands = 0 : i64, tpu.core_type = #tpu.core_type<tc>, window_params = [{pipeline_mode = #tpu.pipeline_mode<synchronous>, transform_indices = @transform_0, window_bounds = array<i64: 4, 768>}, {pipeline_mode = #tpu.pipeline_mode<synchronous>, transform_indices = @transform_1, window_bounds = array<i64: 8, 48>}, {pipeline_mode = #tpu.pipeline_mode<synchronous>, transform_indices = @transform_2, window_bounds = array<i64: 8, 80>}, {pipeline_mode = #tpu.pipeline_mode<synchronous>, transform_indices = @transform_3, window_bounds = array<i64: 8, 512>}]} {
    %c0 = arith.constant 0 : index
    %c0_0 = arith.constant 0 : index
    %0 = vector.load %arg1[%c0, %c0_0] : memref<4x768xbf16, #tpu.memory_space<vmem>>, vector<4x768xbf16>
    %c0_1 = arith.constant 0 : index
    %c0_2 = arith.constant 0 : index
    %1 = vector.load %arg2[%c0_1, %c0_2] : memref<8x48xbf16, #tpu.memory_space<vmem>>, vector<8x48xbf16>
    %2 = vector.extract_strided_slice %0 {offsets = [0, 0], sizes = [4, 672], strides = [1, 1]} : vector<4x768xbf16> to vector<4x672xbf16>
    %3 = vector.extract_strided_slice %0 {offsets = [0, 1], sizes = [4, 672], strides = [1, 1]} : vector<4x768xbf16> to vector<4x672xbf16>
    %4 = vector.extract_strided_slice %0 {offsets = [0, 2], sizes = [4, 672], strides = [1, 1]} : vector<4x768xbf16> to vector<4x672xbf16>
    %5 = vector.extract_strided_slice %2 {offsets = [0, 0], sizes = [4, 640], strides = [1, 1]} : vector<4x672xbf16> to vector<4x640xbf16>
    %6 = vector.extract_strided_slice %3 {offsets = [0, 0], sizes = [4, 640], strides = [1, 1]} : vector<4x672xbf16> to vector<4x640xbf16>
    %7 = vector.extract_strided_slice %4 {offsets = [0, 0], sizes = [4, 640], strides = [1, 1]} : vector<4x672xbf16> to vector<4x640xbf16>
    %8 = vector.extract_strided_slice %2 {offsets = [0, 16], sizes = [4, 640], strides = [1, 1]} : vector<4x672xbf16> to vector<4x640xbf16>
    %9 = vector.extract_strided_slice %3 {offsets = [0, 16], sizes = [4, 640], strides = [1, 1]} : vector<4x672xbf16> to vector<4x640xbf16>
    %10 = vector.extract_strided_slice %4 {offsets = [0, 16], sizes = [4, 640], strides = [1, 1]} : vector<4x672xbf16> to vector<4x640xbf16>
    %11 = vector.extract_strided_slice %2 {offsets = [0, 32], sizes = [4, 640], strides = [1, 1]} : vector<4x672xbf16> to vector<4x640xbf16>
    %12 = vector.extract_strided_slice %3 {offsets = [0, 32], sizes = [4, 640], strides = [1, 1]} : vector<4x672xbf16> to vector<4x640xbf16>
    %13 = vector.extract_strided_slice %4 {offsets = [0, 32], sizes = [4, 640], strides = [1, 1]} : vector<4x672xbf16> to vector<4x640xbf16>
    %cst = arith.constant 0.000000e+00 : bf16
    %14 = vector.broadcast %cst : bf16 to vector<12x640xbf16>
    %15 = tpu.concatenate %5, %6, %7, %8, %9, %10, %11, %12, %13, %14 in 0 : vector<4x640xbf16>, vector<4x640xbf16>, vector<4x640xbf16>, vector<4x640xbf16>, vector<4x640xbf16>, vector<4x640xbf16>, vector<4x640xbf16>, vector<4x640xbf16>, vector<4x640xbf16>, vector<12x640xbf16> -> vector<48x640xbf16>
    %cst_3 = arith.constant dense<0.000000e+00> : vector<8x640xf32>
    %16 = tpu.matmul %1, %15, %cst_3 {dimension_numbers = #tpu.dot_dimension_numbers<[1], [0], [0], [1], [0, 0, 1, 1], [], []>} : vector<8x48xbf16>, vector<48x640xbf16>, vector<8x640xf32> -> vector<8x640xf32>
    %cst_4 = arith.constant 0.000000e+00 : f32
    %17 = vector.broadcast %cst_4 : f32 to vector<8x640xf32>
    %18 = arith.maximumf %16, %17 : vector<8x640xf32>
    %19 = arith.truncf %18 : vector<8x640xf32> to vector<8x640xbf16>
    %c0_5 = arith.constant 0 : index
    %c0_6 = arith.constant 0 : index
    %20 = vector.load %arg3[%c0_5, %c0_6] : memref<8x80xbf16, #tpu.memory_space<vmem>>, vector<8x80xbf16>
    %21 = vector.extract_strided_slice %19 {offsets = [0, 0], sizes = [8, 544], strides = [1, 1]} : vector<8x640xbf16> to vector<8x544xbf16>
    %22 = vector.extract_strided_slice %19 {offsets = [0, 1], sizes = [8, 544], strides = [1, 1]} : vector<8x640xbf16> to vector<8x544xbf16>
    %23 = vector.extract_strided_slice %19 {offsets = [0, 2], sizes = [8, 544], strides = [1, 1]} : vector<8x640xbf16> to vector<8x544xbf16>
    %24 = vector.extract_strided_slice %21 {offsets = [0, 0], sizes = [8, 512], strides = [1, 1]} : vector<8x544xbf16> to vector<8x512xbf16>
    %25 = vector.extract_strided_slice %22 {offsets = [0, 0], sizes = [8, 512], strides = [1, 1]} : vector<8x544xbf16> to vector<8x512xbf16>
    %26 = vector.extract_strided_slice %23 {offsets = [0, 0], sizes = [8, 512], strides = [1, 1]} : vector<8x544xbf16> to vector<8x512xbf16>
    %27 = vector.extract_strided_slice %21 {offsets = [0, 16], sizes = [8, 512], strides = [1, 1]} : vector<8x544xbf16> to vector<8x512xbf16>
    %28 = vector.extract_strided_slice %22 {offsets = [0, 16], sizes = [8, 512], strides = [1, 1]} : vector<8x544xbf16> to vector<8x512xbf16>
    %29 = vector.extract_strided_slice %23 {offsets = [0, 16], sizes = [8, 512], strides = [1, 1]} : vector<8x544xbf16> to vector<8x512xbf16>
    %30 = vector.extract_strided_slice %21 {offsets = [0, 32], sizes = [8, 512], strides = [1, 1]} : vector<8x544xbf16> to vector<8x512xbf16>
    %31 = vector.extract_strided_slice %22 {offsets = [0, 32], sizes = [8, 512], strides = [1, 1]} : vector<8x544xbf16> to vector<8x512xbf16>
    %32 = vector.extract_strided_slice %23 {offsets = [0, 32], sizes = [8, 512], strides = [1, 1]} : vector<8x544xbf16> to vector<8x512xbf16>
    %cst_7 = arith.constant 0.000000e+00 : bf16
    %33 = vector.broadcast %cst_7 : bf16 to vector<8x512xbf16>
    %34 = tpu.concatenate %24, %25, %26, %27, %28, %29, %30, %31, %32, %33 in 0 : vector<8x512xbf16>, vector<8x512xbf16>, vector<8x512xbf16>, vector<8x512xbf16>, vector<8x512xbf16>, vector<8x512xbf16>, vector<8x512xbf16>, vector<8x512xbf16>, vector<8x512xbf16>, vector<8x512xbf16> -> vector<80x512xbf16>
    %cst_8 = arith.constant dense<0.000000e+00> : vector<8x512xf32>
    %35 = tpu.matmul %20, %34, %cst_8 {dimension_numbers = #tpu.dot_dimension_numbers<[1], [0], [0], [1], [0, 0, 1, 1], [], []>} : vector<8x80xbf16>, vector<80x512xbf16>, vector<8x512xf32> -> vector<8x512xf32>
    %cst_9 = arith.constant 0.000000e+00 : f32
    %36 = vector.broadcast %cst_9 : f32 to vector<8x512xf32>
    %37 = arith.maximumf %35, %36 : vector<8x512xf32>
    %c0_10 = arith.constant 0 : index
    %c0_11 = arith.constant 0 : index
    %38 = vector.load %arg4[%c0_10, %c0_11] : memref<8x512xf32, #tpu.memory_space<vmem>>, vector<8x512xf32>
    tpu.vector_store %arg4[%c0_10, %c0_11], %37 {strides = array<i32>} : memref<8x512xf32, #tpu.memory_space<vmem>>, vector<8x512xf32>,
    return
  }
  func.func @transform_0(%arg0: i32) -> (i32, i32) {
    %c0_i32 = arith.constant 0 : i32
    %c0_i32_0 = arith.constant 0 : i32
    %c0_i32_1 = arith.constant 0 : i32
    return %c0_i32, %c0_i32_0 : i32, i32
  }
  func.func @transform_1(%arg0: i32) -> (i32, i32) {
    %c0_i32 = arith.constant 0 : i32
    %c0_i32_0 = arith.constant 0 : i32
    %c0_i32_1 = arith.constant 0 : i32
    return %c0_i32, %c0_i32_0 : i32, i32
  }
  func.func @transform_2(%arg0: i32) -> (i32, i32) {
    %c0_i32 = arith.constant 0 : i32
    %c0_i32_0 = arith.constant 0 : i32
    %c0_i32_1 = arith.constant 0 : i32
    return %c0_i32, %c0_i32_0 : i32, i32
  }
  func.func @transform_3(%arg0: i32) -> (i32, i32) {
    %c0_i32 = arith.constant 0 : i32
    %c0_i32_0 = arith.constant 0 : i32
    %c0_i32_1 = arith.constant 0 : i32
    return %c0_i32, %c0_i32_0 : i32, i32
  }
}

</mosaic_0001>

<llo_original>
// kernel: double_conv.1
$region0: #{double_conv.1}
  #allocation0 [shape = 'u32[]', space=smem, size = 0x4, offset = 0x4, fixed_abs, tag = 'smem constant byte address 0x4 - core index']
  #allocation1 [shape = 'u32[144,128]{1,0:T(1,128)}', space=vmem, size = 0x12000, scoped, tag = 'internal scratch']
  %s0 = inlined_call_operand.vmem [shape: bf16[4,768], index: 0, kind: input, shape index: {}]
  %s1 = inlined_call_operand.vmem [shape: bf16[8,48], index: 1, kind: input, shape index: {}]
  %s2 = inlined_call_operand.vmem [shape: bf16[8,80], index: 2, kind: input, shape index: {}]
  %s3 = inlined_call_operand.vmem [shape: f32[8,512], index: 3, kind: output, shape index: {}]
  %s4 = sld [smem:[#allocation0]]
  $region22: #{double_conv.1} parent=0
    _
  %s6 = ssub.s32 1, %s4
  %s7 = scalar_select 0, %s6, %s4
  // Predicated region
  $region2: #{double_conv.1} parent=0 // pred_check
    _
  $region3: #{double_conv.1} parent=0 // pred_check_branch
    %9 = sbr.rel (0) target = $region5
  $region4: #{double_conv.1} parent=0 // pred_region
    _
  $region5: #{double_conv.1} parent=0 // pred_fallthru
    _
  // Predicated region
  $region6: #{double_conv.1} parent=0 // pred_check
    _
  $region7: #{double_conv.1} parent=0 // pred_check_branch
    %11 = sbr.rel (0) target = $region9
  $region8: #{double_conv.1} parent=0 // pred_region
    _
  $region9: #{double_conv.1} parent=0 // pred_fallthru
    _
  // Predicated region
  $region10: #{double_conv.1} parent=0 // pred_check
    _
  $region11: #{double_conv.1} parent=0 // pred_check_branch
    %13 = sbr.rel (0) target = $region13
  $region12: #{double_conv.1} parent=0 // pred_region
    _
  $region13: #{double_conv.1} parent=0 // pred_fallthru
    _
  %v15 = vld [vmem:[%s0] sm:$0xff]
  %v16 = vld [vmem:[%s0 + $0x8] sm:$0xf]
  %v17 = vld [vmem:[%s1] sm:$0xf]
  %v20 = vcombine.high %v15, %v15
  %v22 = vunpack.c.l.s4 1983009808
  %v23 = vunpack.c.0.s8 %v22
  %v24 = vlaneseq
  %v25 = vshrl.u32 %v24, 7
  %v26 = vsub.s32 %v23, %v25
  %v27 = vrot.slane %v15, %v26
  %v29 = vunpack.c.l.s4 1983009808
  %v30 = vunpack.c.0.s8 %v29
  %v31 = vlaneseq
  %v32 = vshrl.u32 %v31, 7
  %v33 = vsub.s32 %v30, %v32
  %v34 = vrot.slane %v20, %v33
  %v35 = vcombine.high %v27, %v27
  %v36 = vcombine.high %v34, %v34
  %v38 = vunpack.c.l.s4 1983009808
  %v39 = vunpack.c.0.s8 %v38
  %v40 = vlaneseq
  %v41 = vshrl.u32 %v40, 7
  %v42 = vsub.s32 %v39, %v41
  %v43 = vrot.slane %v16, %v42
  %v44 = vcombine.low %v15, %v15
  %v46 = vunpack.c.l.s4 1983009808
  %v47 = vunpack.c.0.s8 %v46
  %v48 = vlaneseq
  %v49 = vshrl.u32 %v48, 7
  %v50 = vsub.s32 %v47, %v49
  %v51 = vrot.slane %v44, %v50
  %v52 = vcombine.high %v51, %v51
  %v53 = vcombine.low %v16, %v16
  %v55 = vunpack.c.l.s4 1983009808
  %v56 = vunpack.c.0.s8 %v55
  %v57 = vlaneseq
  %v58 = vshrl.u32 %v57, 7
  %v59 = vsub.s32 %v56, %v58
  %v60 = vrot.slane %v53, %v59
  %v61 = vcombine.high %v60, %v60
  %62 = vrot.lane.b32.xlu0 %v51, 127
  %v63 = vpop.permute.xlu0 %62
  %64 = vrot.lane.b32.xlu0 %v52, 127
  %v65 = vpop.permute.xlu0 %64
  %66 = vrot.lane.b32.xlu0 %v27, 127
  %v67 = vpop.permute.xlu0 %66
  %68 = vrot.lane.b32.xlu0 %v35, 127
  %v69 = vpop.permute.xlu0 %68
  %70 = vrot.lane.b32.xlu0 %v60, 127
  %v71 = vpop.permute.xlu0 %70
  %72 = vrot.lane.b32.xlu0 %v61, 127
  %v73 = vpop.permute.xlu0 %72
  %vm74 = vcmask 1039360
  %v75 = vsel %vm74, %v63, %v65
  %v76 = vsel %vm74, %v65, %v67
  %v77 = vsel %vm74, %v67, %v69
  %v78 = vsel %vm74, %v69, %v71
  %v79 = vsel %vm74, %v71, %v73
  %v80 = vcombine.low %v27, %v27
  %v81 = vcombine.low %v34, %v34
  %v82 = vcombine.low %v43, %v43
  %83 = vrot.lane.b32.xlu0 %v80, 126
  %v84 = vpop.permute.xlu0 %83
  %85 = vrot.lane.b32.xlu0 %v27, 126
  %v86 = vpop.permute.xlu0 %85
  %87 = vrot.lane.b32.xlu0 %v81, 126
  %v88 = vpop.permute.xlu0 %87
  %89 = vrot.lane.b32.xlu0 %v34, 126
  %v90 = vpop.permute.xlu0 %89
  %91 = vrot.lane.b32.xlu0 %v82, 126
  %v92 = vpop.permute.xlu0 %91
  %93 = vrot.lane.b32.xlu0 %v43, 126
  %v94 = vpop.permute.xlu0 %93
  %vm95 = vcmask 1031168
  %v96 = vsel %vm95, %v84, %v86
  %v97 = vsel %vm95, %v86, %v88
  %v98 = vsel %vm95, %v88, %v90
  %v99 = vsel %vm95, %v90, %v92
  %v100 = vsel %vm95, %v92, %v94
  %v101 = vcombine.low %v51, %v51
  %v102 = vcombine.low %v60, %v60
  %103 = vrot.lane.b32.xlu0 %v101, 112
  %v104 = vpop.permute.xlu0 %103
  %105 = vrot.lane.b32.xlu0 %v51, 112
  %v106 = vpop.permute.xlu0 %105
  %107 = vrot.lane.b32.xlu0 %v80, 112
  %v108 = vpop.permute.xlu0 %107
  %109 = vrot.lane.b32.xlu0 %v27, 112
  %v110 = vpop.permute.xlu0 %109
  %111 = vrot.lane.b32.xlu0 %v102, 112
  %v112 = vpop.permute.xlu0 %111
  %113 = vrot.lane.b32.xlu0 %v60, 112
  %v114 = vpop.permute.xlu0 %113
  %vm115 = vcmask 916480
  %v116 = vsel %vm115, %v104, %v106
  %v117 = vsel %vm115, %v106, %v108
  %v118 = vsel %vm115, %v108, %v110
  %v119 = vsel %vm115, %v110, %v112
  %v120 = vsel %vm115, %v112, %v114
  %v121 = vcombine.high %v43, %v43
  %122 = vrot.lane.b32.xlu0 %v27, 111
  %v123 = vpop.permute.xlu0 %122
  %124 = vrot.lane.b32.xlu0 %v35, 111
  %v125 = vpop.permute.xlu0 %124
  %126 = vrot.lane.b32.xlu0 %v34, 111
  %v127 = vpop.permute.xlu0 %126
  %128 = vrot.lane.b32.xlu0 %v36, 111
  %v129 = vpop.permute.xlu0 %128
  %130 = vrot.lane.b32.xlu0 %v43, 111
  %v131 = vpop.permute.xlu0 %130
  %132 = vrot.lane.b32.xlu0 %v121, 111
  %v133 = vpop.permute.xlu0 %132
  %vm134 = vcmask 908288
  %v135 = vsel %vm134, %v123, %v125
  %v136 = vsel %vm134, %v125, %v127
  %v137 = vsel %vm134, %v127, %v129
  %v138 = vsel %vm134, %v129, %v131
  %v139 = vsel %vm134, %v131, %v133
  %140 = vrot.lane.b32.xlu0 %v51, 110
  %v141 = vpop.permute.xlu0 %140
  %142 = vrot.lane.b32.xlu0 %v52, 110
  %v143 = vpop.permute.xlu0 %142
  %144 = vrot.lane.b32.xlu0 %v27, 110
  %v145 = vpop.permute.xlu0 %144
  %146 = vrot.lane.b32.xlu0 %v35, 110
  %v147 = vpop.permute.xlu0 %146
  %148 = vrot.lane.b32.xlu0 %v60, 110
  %v149 = vpop.permute.xlu0 %148
  %150 = vrot.lane.b32.xlu0 %v61, 110
  %v151 = vpop.permute.xlu0 %150
  %vm152 = vcmask 900096
  %v153 = vsel %vm152, %v141, %v143
  %v154 = vsel %vm152, %v143, %v145
  %v155 = vsel %vm152, %v145, %v147
  %v156 = vsel %vm152, %v147, %v149
  %v157 = vsel %vm152, %v149, %v151
  %158 = vrot.lane.b32.xlu0 %v80, 96
  %v159 = vpop.permute.xlu0 %158
  %160 = vrot.lane.b32.xlu0 %v27, 96
  %v161 = vpop.permute.xlu0 %160
  %162 = vrot.lane.b32.xlu0 %v81, 96
  %v163 = vpop.permute.xlu0 %162
  %164 = vrot.lane.b32.xlu0 %v34, 96
  %v165 = vpop.permute.xlu0 %164
  %166 = vrot.lane.b32.xlu0 %v82, 96
  %v167 = vpop.permute.xlu0 %166
  %168 = vrot.lane.b32.xlu0 %v43, 96
  %v169 = vpop.permute.xlu0 %168
  %vm170 = vcmask 785408
  %v171 = vsel %vm170, %v159, %v161
  %v172 = vsel %vm170, %v161, %v163
  %v173 = vsel %vm170, %v163, %v165
  %v174 = vsel %vm170, %v165, %v167
  %v175 = vsel %vm170, %v167, %v169
  %176 = vrot.lane.b32.xlu0 %v101, 95
  %v177 = vpop.permute.xlu0 %176
  %178 = vrot.lane.b32.xlu0 %v51, 95
  %v179 = vpop.permute.xlu0 %178
  %180 = vrot.lane.b32.xlu0 %v80, 95
  %v181 = vpop.permute.xlu0 %180
  %182 = vrot.lane.b32.xlu0 %v27, 95
  %v183 = vpop.permute.xlu0 %182
  %184 = vrot.lane.b32.xlu0 %v102, 95
  %v185 = vpop.permute.xlu0 %184
  %186 = vrot.lane.b32.xlu0 %v60, 95
  %v187 = vpop.permute.xlu0 %186
  %vm188 = vcmask 777216
  %v189 = vsel %vm188, %v177, %v179
  %v190 = vsel %vm188, %v179, %v181
  %v191 = vsel %vm188, %v181, %v183
  %v192 = vsel %vm188, %v183, %v185
  %v193 = vsel %vm188, %v185, %v187
  %194 = vrot.lane.b32.xlu0 %v27, 94
  %v195 = vpop.permute.xlu0 %194
  %196 = vrot.lane.b32.xlu0 %v35, 94
  %v197 = vpop.permute.xlu0 %196
  %198 = vrot.lane.b32.xlu0 %v34, 94
  %v199 = vpop.permute.xlu0 %198
  %200 = vrot.lane.b32.xlu0 %v36, 94
  %v201 = vpop.permute.xlu0 %200
  %202 = vrot.lane.b32.xlu0 %v43, 94
  %v203 = vpop.permute.xlu0 %202
  %204 = vrot.lane.b32.xlu0 %v121, 94
  %v205 = vpop.permute.xlu0 %204
  %vm206 = vcmask 769024
  %v207 = vsel %vm206, %v195, %v197
  %v208 = vsel %vm206, %v197, %v199
  %v209 = vsel %vm206, %v199, %v201
  %v210 = vsel %vm206, %v201, %v203
  %v211 = vsel %vm206, %v203, %v205
  %vm212 = vcmask 1041408
  %v215 = vsel %vm212, %v27, %v75
  %v218 = vsel %vm212, %v35, %v76
  %v221 = vsel %vm212, %v34, %v77
  %v224 = vsel %vm212, %v36, %v78
  %v227 = vsel %vm212, %v43, %v79
  %vm228 = vcmask 1043456
  %v230 = vsel %vm228, %v215, %v96
  %v232 = vsel %vm228, %v218, %v97
  %v234 = vsel %vm228, %v221, %v98
  %v236 = vsel %vm228, %v224, %v99
  %v238 = vsel %vm228, %v227, %v100
  %vm239 = vcmask 1045504
  %v241 = vsel %vm239, %v230, %v116
  %v244 = vsel %vm239, %v232, %v117
  %v247 = vsel %vm239, %v234, %v118
  %v250 = vsel %vm239, %v236, %v119
  %v253 = vsel %vm239, %v238, %v120
  %v257 = vsel %vm212, %v135, %v153
  %v260 = vsel %vm212, %v136, %v154
  %v263 = vsel %vm212, %v137, %v155
  %v266 = vsel %vm212, %v138, %v156
  %v269 = vsel %vm212, %v139, %v157
  %v271 = vsel %vm228, %v257, %v171
  %v273 = vsel %vm228, %v260, %v172
  %v275 = vsel %vm228, %v263, %v173
  %v277 = vsel %vm228, %v266, %v174
  %v279 = vsel %vm228, %v269, %v175
  %v281 = vsel %vm239, %v271, %v189
  %v284 = vsel %vm239, %v273, %v190
  %v287 = vsel %vm239, %v275, %v191
  %v290 = vsel %vm239, %v277, %v192
  %v293 = vsel %vm239, %v279, %v193
  %v297 = vsel %vm212, %v207, 0
  %v300 = vsel %vm212, %v208, 0
  %v303 = vsel %vm212, %v209, 0
  %v306 = vsel %vm212, %v210, 0
  %v309 = vsel %vm212, %v211, 0
  %vm311 = vcmask 392192
  %v313 = vsel %vm311, %v17, 0
  %315 = vmatprep.subr.bf16.mxu0 %v244
  %316 = vmatpush1.bf16.msra.mxu0 %v241
  %317 = vmatprep.subr.bf16.mxu0 %v284
  %318 = vmatpush1.bf16.msra.mxu0 %v281
  %319 = vmatprep.subr.bf16.mxu0 %v300
  %320 = vmatpush1.bf16.msra.mxu0 %v297
  %321 = vmatprep.subr.bf16.mxu0 0
  %322 = vmatpush1.bf16.msra.mxu0 0
  %323 = vmatprep.subr.bf16.mxu0 0
  %324 = vmatpush1.bf16.msra.mxu0 0
  %325 = vmatprep.subr.bf16.mxu0 0
  %326 = vmatpush1.bf16.msra.mxu0 0
  %327 = vmatprep.subr.bf16.mxu0 0
  %328 = vmatpush1.bf16.msra.mxu0 0
  %329 = vmatprep.subr.bf16.mxu0 0
  %330 = vmatpush1.bf16.msra.mxu0 0
  %331 = vmatprep.subr.bf16.mxu0 0
  %332 = vmatpush1.bf16.msra.mxu0 0
  %333 = vmatprep.subr.bf16.mxu0 0
  %334 = vmatpush1.bf16.msra.mxu0 0
  %335 = vmatprep.subr.bf16.mxu0 0
  %336 = vmatpush1.bf16.msra.mxu0 0
  %337 = vmatprep.subr.bf16.mxu0 0
  %338 = vmatpush1.bf16.msra.mxu0 0
  %339 = vmatprep.subr.bf16.mxu0 0
  %340 = vmatpush1.bf16.msra.mxu0 0
  %341 = vmatprep.subr.bf16.mxu0 0
  %342 = vmatpush1.bf16.msra.mxu0 0
  %343 = vmatprep.subr.bf16.mxu0 0
  %344 = vmatpush1.bf16.msra.mxu0 0
  %345 = vmatprep.subr.bf16.mxu0 0
  %346 = vmatpush1.bf16.msra.mxu0 0
  %347 = vmatprep.mubr.bf16.mxu0 0
  %348 = vmatmul.mubr.bf16.gmra.mrb[0].mxu0 %v313
  %v349 = vpop.f32.mrb[0].mxu0
  %v350 = vadd.f32 0.0, %v349
  %v351 = vpop.f32.mrb[0].mxu0
  %v352 = vadd.f32 0.0, %v351
  %v353 = vpop.f32.mrb[0].mxu0
  %v354 = vpop.f32.mrb[0].mxu0
  %355 = vdwg.mxu0
  %356 = vmatprep.subr.bf16.mxu0 %v250
  %357 = vmatpush1.bf16.msra.mxu0 %v247
  %358 = vmatprep.subr.bf16.mxu0 %v290
  %359 = vmatpush1.bf16.msra.mxu0 %v287
  %360 = vmatprep.subr.bf16.mxu0 %v306
  %361 = vmatpush1.bf16.msra.mxu0 %v303
  %362 = vmatprep.subr.bf16.mxu0 0
  %363 = vmatpush1.bf16.msra.mxu0 0
  %364 = vmatprep.subr.bf16.mxu0 0
  %365 = vmatpush1.bf16.msra.mxu0 0
  %366 = vmatprep.subr.bf16.mxu0 0
  %367 = vmatpush1.bf16.msra.mxu0 0
  %368 = vmatprep.subr.bf16.mxu0 0
  %369 = vmatpush1.bf16.msra.mxu0 0
  %370 = vmatprep.subr.bf16.mxu0 0
  %371 = vmatpush1.bf16.msra.mxu0 0
  %372 = vmatprep.subr.bf16.mxu0 0
  %373 = vmatpush1.bf16.msra.mxu0 0
  %374 = vmatprep.subr.bf16.mxu0 0
  %375 = vmatpush1.bf16.msra.mxu0 0
  %376 = vmatprep.subr.bf16.mxu0 0
  %377 = vmatpush1.bf16.msra.mxu0 0
  %378 = vmatprep.subr.bf16.mxu0 0
  %379 = vmatpush1.bf16.msra.mxu0 0
  %380 = vmatprep.subr.bf16.mxu0 0
  %381 = vmatpush1.bf16.msra.mxu0 0
  %382 = vmatprep.subr.bf16.mxu0 0
  %383 = vmatpush1.bf16.msra.mxu0 0
  %384 = vmatprep.subr.bf16.mxu0 0
  %385 = vmatpush1.bf16.msra.mxu0 0
  %386 = vmatprep.subr.bf16.mxu0 0
  %387 = vmatpush1.bf16.msra.mxu0 0
  %388 = vmatprep.mubr.bf16.mxu0 0
  %389 = vmatmul.mubr.bf16.gmra.mrb[0].mxu0 %v313
  %v390 = vpop.f32.mrb[0].mxu0
  %v391 = vadd.f32 0.0, %v390
  %v392 = vpop.f32.mrb[0].mxu0
  %v393 = vadd.f32 0.0, %v392
  %v394 = vpop.f32.mrb[0].mxu0
  %v395 = vpop.f32.mrb[0].mxu0
  %396 = vdwg.mxu0
  %397 = vmatprep.subr.bf16.mxu0 0
  %398 = vmatpush1.bf16.msra.mxu0 %v253
  %399 = vmatprep.subr.bf16.mxu0 0
  %400 = vmatpush1.bf16.msra.mxu0 %v293
  %401 = vmatprep.subr.bf16.mxu0 0
  %402 = vmatpush1.bf16.msra.mxu0 %v309
  %403 = vmatprep.subr.bf16.mxu0 0
  %404 = vmatpush1.bf16.msra.mxu0 0
  %405 = vmatprep.subr.bf16.mxu0 0
  %406 = vmatpush1.bf16.msra.mxu0 0
  %407 = vmatprep.subr.bf16.mxu0 0
  %408 = vmatpush1.bf16.msra.mxu0 0
  %409 = vmatprep.subr.bf16.mxu0 0
  %410 = vmatpush1.bf16.msra.mxu0 0
  %411 = vmatprep.subr.bf16.mxu0 0
  %412 = vmatpush1.bf16.msra.mxu0 0
  %413 = vmatprep.subr.bf16.mxu0 0
  %414 = vmatpush1.bf16.msra.mxu0 0
  %415 = vmatprep.subr.bf16.mxu0 0
  %416 = vmatpush1.bf16.msra.mxu0 0
  %417 = vmatprep.subr.bf16.mxu0 0
  %418 = vmatpush1.bf16.msra.mxu0 0
  %419 = vmatprep.subr.bf16.mxu0 0
  %420 = vmatpush1.bf16.msra.mxu0 0
  %421 = vmatprep.subr.bf16.mxu0 0
  %422 = vmatpush1.bf16.msra.mxu0 0
  %423 = vmatprep.subr.bf16.mxu0 0
  %424 = vmatpush1.bf16.msra.mxu0 0
  %425 = vmatprep.subr.bf16.mxu0 0
  %426 = vmatpush1.bf16.msra.mxu0 0
  %427 = vmatprep.subr.bf16.mxu0 0
  %428 = vmatpush1.bf16.msra.mxu0 0
  %429 = vmatprep.mubr.bf16.mxu0 0
  %430 = vmatmul.mubr.bf16.gmra.mrb[0].mxu0 %v313
  %v431 = vpop.f32.mrb[0].mxu0
  %v432 = vadd.f32 0.0, %v431
  %v433 = vpop.f32.mrb[0].mxu0
  %v434 = vpop.f32.mrb[0].mxu0
  %v435 = vpop.f32.mrb[0].mxu0
  %436 = vdwg.mxu0
  %v437 = vmax.f32 %v350, 0.0
  %v438 = vmax.f32 %v352, 0.0
  %v439 = vmax.f32 %v391, 0.0
  %v440 = vmax.f32 %v393, 0.0
  %v441 = vmax.f32 %v432, 0.0
  %v442 = vpack.c.bf16 %v437, %v437
  %v443 = vpack.c.bf16 %v438, %v438
  %v444 = vpack.c.bf16 %v439, %v439
  %v445 = vpack.c.bf16 %v440, %v440
  %v446 = vpack.c.bf16 %v441, %v441
  %v447 = vld [vmem:[%s2] sm:$0xf]
  %v453 = vrot.slane %v442, 4
  %v454 = vrot.slane %v443, 4
  %v455 = vrot.slane %v444, 4
  %v456 = vrot.slane %v445, 4
  %v457 = vrot.slane %v446, 4
  %458 = vrot.lane.b32.xlu0 %v453, 127
  %v459 = vpop.permute.xlu0 %458
  %460 = vrot.lane.b32.xlu0 %v454, 127
  %v461 = vpop.permute.xlu0 %460
  %462 = vrot.lane.b32.xlu0 %v455, 127
  %v463 = vpop.permute.xlu0 %462
  %464 = vrot.lane.b32.xlu0 %v456, 127
  %v465 = vpop.permute.xlu0 %464
  %466 = vrot.lane.b32.xlu0 %v457, 127
  %v467 = vpop.permute.xlu0 %466
  %v468 = vsel %vm74, %v459, %v461
  %v469 = vsel %vm74, %v461, %v463
  %v470 = vsel %vm74, %v463, %v465
  %v471 = vsel %vm74, %v465, %v467
  %472 = vrot.lane.b32.xlu0 %v442, 126
  %v473 = vpop.permute.xlu0 %472
  %474 = vrot.lane.b32.xlu0 %v443, 126
  %v475 = vpop.permute.xlu0 %474
  %476 = vrot.lane.b32.xlu0 %v444, 126
  %v477 = vpop.permute.xlu0 %476
  %478 = vrot.lane.b32.xlu0 %v445, 126
  %v479 = vpop.permute.xlu0 %478
  %480 = vrot.lane.b32.xlu0 %v446, 126
  %v481 = vpop.permute.xlu0 %480
  %v482 = vsel %vm95, %v473, %v475
  %v483 = vsel %vm95, %v475, %v477
  %v484 = vsel %vm95, %v477, %v479
  %v485 = vsel %vm95, %v479, %v481
  %486 = vrot.lane.b32.xlu0 %v453, 112
  %v487 = vpop.permute.xlu0 %486
  %488 = vrot.lane.b32.xlu0 %v454, 112
  %v489 = vpop.permute.xlu0 %488
  %490 = vrot.lane.b32.xlu0 %v455, 112
  %v491 = vpop.permute.xlu0 %490
  %492 = vrot.lane.b32.xlu0 %v456, 112
  %v493 = vpop.permute.xlu0 %492
  %494 = vrot.lane.b32.xlu0 %v457, 112
  %v495 = vpop.permute.xlu0 %494
  %v496 = vsel %vm115, %v487, %v489
  %v497 = vsel %vm115, %v489, %v491
  %v498 = vsel %vm115, %v491, %v493
  %v499 = vsel %vm115, %v493, %v495
  %500 = vrot.lane.b32.xlu0 %v442, 111
  %v501 = vpop.permute.xlu0 %500
  %502 = vrot.lane.b32.xlu0 %v443, 111
  %v503 = vpop.permute.xlu0 %502
  %504 = vrot.lane.b32.xlu0 %v444, 111
  %v505 = vpop.permute.xlu0 %504
  %506 = vrot.lane.b32.xlu0 %v445, 111
  %v507 = vpop.permute.xlu0 %506
  %508 = vrot.lane.b32.xlu0 %v446, 111
  %v509 = vpop.permute.xlu0 %508
  %v510 = vsel %vm134, %v501, %v503
  %v511 = vsel %vm134, %v503, %v505
  %v512 = vsel %vm134, %v505, %v507
  %v513 = vsel %vm134, %v507, %v509
  %514 = vrot.lane.b32.xlu0 %v453, 110
  %v515 = vpop.permute.xlu0 %514
  %516 = vrot.lane.b32.xlu0 %v454, 110
  %v517 = vpop.permute.xlu0 %516
  %518 = vrot.lane.b32.xlu0 %v455, 110
  %v519 = vpop.permute.xlu0 %518
  %520 = vrot.lane.b32.xlu0 %v456, 110
  %v521 = vpop.permute.xlu0 %520
  %522 = vrot.lane.b32.xlu0 %v457, 110
  %v523 = vpop.permute.xlu0 %522
  %v524 = vsel %vm152, %v515, %v517
  %v525 = vsel %vm152, %v517, %v519
  %v526 = vsel %vm152, %v519, %v521
  %v527 = vsel %vm152, %v521, %v523
  %528 = vrot.lane.b32.xlu0 %v442, 96
  %v529 = vpop.permute.xlu0 %528
  %530 = vrot.lane.b32.xlu0 %v443, 96
  %v531 = vpop.permute.xlu0 %530
  %532 = vrot.lane.b32.xlu0 %v444, 96
  %v533 = vpop.permute.xlu0 %532
  %534 = vrot.lane.b32.xlu0 %v445, 96
  %v535 = vpop.permute.xlu0 %534
  %536 = vrot.lane.b32.xlu0 %v446, 96
  %v537 = vpop.permute.xlu0 %536
  %v538 = vsel %vm170, %v529, %v531
  %v539 = vsel %vm170, %v531, %v533
  %v540 = vsel %vm170, %v533, %v535
  %v541 = vsel %vm170, %v535, %v537
  %542 = vrot.lane.b32.xlu0 %v453, 95
  %v543 = vpop.permute.xlu0 %542
  %544 = vrot.lane.b32.xlu0 %v454, 95
  %v545 = vpop.permute.xlu0 %544
  %546 = vrot.lane.b32.xlu0 %v455, 95
  %v547 = vpop.permute.xlu0 %546
  %548 = vrot.lane.b32.xlu0 %v456, 95
  %v549 = vpop.permute.xlu0 %548
  %550 = vrot.lane.b32.xlu0 %v457, 95
  %v551 = vpop.permute.xlu0 %550
  %v552 = vsel %vm188, %v543, %v545
  %v553 = vsel %vm188, %v545, %v547
  %v554 = vsel %vm188, %v547, %v549
  %v555 = vsel %vm188, %v549, %v551
  %556 = vrot.lane.b32.xlu0 %v442, 94
  %v557 = vpop.permute.xlu0 %556
  %558 = vrot.lane.b32.xlu0 %v443, 94
  %v559 = vpop.permute.xlu0 %558
  %560 = vrot.lane.b32.xlu0 %v444, 94
  %v561 = vpop.permute.xlu0 %560
  %562 = vrot.lane.b32.xlu0 %v445, 94
  %v563 = vpop.permute.xlu0 %562
  %564 = vrot.lane.b32.xlu0 %v446, 94
  %v565 = vpop.permute.xlu0 %564
  %v566 = vsel %vm206, %v557, %v559
  %v567 = vsel %vm206, %v559, %v561
  %v568 = vsel %vm206, %v561, %v563
  %v569 = vsel %vm206, %v563, %v565
  %v572 = vsel %vm228, %v442, %v468
  %v576 = vsel %vm228, %v443, %v469
  %v580 = vsel %vm228, %v444, %v470
  %v584 = vsel %vm228, %v445, %v471
  %v588 = vsel %vm228, %v482, %v496
  %v592 = vsel %vm228, %v483, %v497
  %v596 = vsel %vm228, %v484, %v498
  %v600 = vsel %vm228, %v485, %v499
  %v604 = vsel %vm228, %v510, %v524
  %v608 = vsel %vm228, %v511, %v525
  %v612 = vsel %vm228, %v512, %v526
  %v616 = vsel %vm228, %v513, %v527
  %v620 = vsel %vm228, %v538, %v552
  %v624 = vsel %vm228, %v539, %v553
  %v628 = vsel %vm228, %v540, %v554
  %v632 = vsel %vm228, %v541, %v555
  %v635 = vsel %vm228, %v566, 0
  %v638 = vsel %vm228, %v567, 0
  %v641 = vsel %vm228, %v568, 0
  %v644 = vsel %vm228, %v569, 0
  %vm646 = vcmask 654336
  %v648 = vsel %vm646, %v447, 0
  %650 = vmatprep.subr.bf16.mxu0 %v576
  %651 = vmatpush1.bf16.msra.mxu0 %v572
  %652 = vmatprep.subr.bf16.mxu0 %v592
  %653 = vmatpush1.bf16.msra.mxu0 %v588
  %654 = vmatprep.subr.bf16.mxu0 %v608
  %655 = vmatpush1.bf16.msra.mxu0 %v604
  %656 = vmatprep.subr.bf16.mxu0 %v624
  %657 = vmatpush1.bf16.msra.mxu0 %v620
  %658 = vmatprep.subr.bf16.mxu0 %v638
  %659 = vmatpush1.bf16.msra.mxu0 %v635
  %660 = vmatprep.subr.bf16.mxu0 0
  %661 = vmatpush1.bf16.msra.mxu0 0
  %662 = vmatprep.subr.bf16.mxu0 0
  %663 = vmatpush1.bf16.msra.mxu0 0
  %664 = vmatprep.subr.bf16.mxu0 0
  %665 = vmatpush1.bf16.msra.mxu0 0
  %666 = vmatprep.subr.bf16.mxu0 0
  %667 = vmatpush1.bf16.msra.mxu0 0
  %668 = vmatprep.subr.bf16.mxu0 0
  %669 = vmatpush1.bf16.msra.mxu0 0
  %670 = vmatprep.subr.bf16.mxu0 0
  %671 = vmatpush1.bf16.msra.mxu0 0
  %672 = vmatprep.subr.bf16.mxu0 0
  %673 = vmatpush1.bf16.msra.mxu0 0
  %674 = vmatprep.subr.bf16.mxu0 0
  %675 = vmatpush1.bf16.msra.mxu0 0
  %676 = vmatprep.subr.bf16.mxu0 0
  %677 = vmatpush1.bf16.msra.mxu0 0
  %678 = vmatprep.subr.bf16.mxu0 0
  %679 = vmatpush1.bf16.msra.mxu0 0
  %680 = vmatprep.subr.bf16.mxu0 0
  %681 = vmatpush1.bf16.msra.mxu0 0
  %682 = vmatprep.mubr.bf16.mxu0 0
  %683 = vmatmul.mubr.bf16.gmra.mrb[0].mxu0 %v648
  %v684 = vpop.f32.mrb[0].mxu0
  %v685 = vadd.f32 0.0, %v684
  %v686 = vpop.f32.mrb[0].mxu0
  %v687 = vadd.f32 0.0, %v686
  %v688 = vpop.f32.mrb[0].mxu0
  %v689 = vpop.f32.mrb[0].mxu0
  %690 = vdwg.mxu0
  %691 = vmatprep.subr.bf16.mxu0 %v584
  %692 = vmatpush1.bf16.msra.mxu0 %v580
  %693 = vmatprep.subr.bf16.mxu0 %v600
  %694 = vmatpush1.bf16.msra.mxu0 %v596
  %695 = vmatprep.subr.bf16.mxu0 %v616
  %696 = vmatpush1.bf16.msra.mxu0 %v612
  %697 = vmatprep.subr.bf16.mxu0 %v632
  %698 = vmatpush1.bf16.msra.mxu0 %v628
  %699 = vmatprep.subr.bf16.mxu0 %v644
  %700 = vmatpush1.bf16.msra.mxu0 %v641
  %701 = vmatprep.subr.bf16.mxu0 0
  %702 = vmatpush1.bf16.msra.mxu0 0
  %703 = vmatprep.subr.bf16.mxu0 0
  %704 = vmatpush1.bf16.msra.mxu0 0
  %705 = vmatprep.subr.bf16.mxu0 0
  %706 = vmatpush1.bf16.msra.mxu0 0
  %707 = vmatprep.subr.bf16.mxu0 0
  %708 = vmatpush1.bf16.msra.mxu0 0
  %709 = vmatprep.subr.bf16.mxu0 0
  %710 = vmatpush1.bf16.msra.mxu0 0
  %711 = vmatprep.subr.bf16.mxu0 0
  %712 = vmatpush1.bf16.msra.mxu0 0
  %713 = vmatprep.subr.bf16.mxu0 0
  %714 = vmatpush1.bf16.msra.mxu0 0
  %715 = vmatprep.subr.bf16.mxu0 0
  %716 = vmatpush1.bf16.msra.mxu0 0
  %717 = vmatprep.subr.bf16.mxu0 0
  %718 = vmatpush1.bf16.msra.mxu0 0
  %719 = vmatprep.subr.bf16.mxu0 0
  %720 = vmatpush1.bf16.msra.mxu0 0
  %721 = vmatprep.subr.bf16.mxu0 0
  %722 = vmatpush1.bf16.msra.mxu0 0
  %723 = vmatprep.mubr.bf16.mxu0 0
  %724 = vmatmul.mubr.bf16.gmra.mrb[0].mxu0 %v648
  %v725 = vpop.f32.mrb[0].mxu0
  %v726 = vadd.f32 0.0, %v725
  %v727 = vpop.f32.mrb[0].mxu0
  %v728 = vadd.f32 0.0, %v727
  %v729 = vpop.f32.mrb[0].mxu0
  %v730 = vpop.f32.mrb[0].mxu0
  %731 = vdwg.mxu0
  %v732 = vmax.f32 %v685, 0.0
  %v733 = vmax.f32 %v687, 0.0
  %v734 = vmax.f32 %v726, 0.0
  %v735 = vmax.f32 %v728, 0.0
  %736 = vst [vmem:[%s3] sm:$0xff] %v732
  %737 = vst [vmem:[%s3 + $0x8] sm:$0xff] %v733
  %738 = vst [vmem:[%s3 + $0x10] sm:$0xff] %v734
  %739 = vst [vmem:[%s3 + $0x18] sm:$0xff] %v735
  // Predicated region
  $region14: #{double_conv.1} parent=0 // pred_check
    _
  $region15: #{double_conv.1} parent=0 // pred_check_branch
    %741 = sbr.rel (0) target = $region17
  $region16: #{double_conv.1} parent=0 // pred_region
    _
  $region17: #{double_conv.1} parent=0 // pred_fallthru
    _
  // Predicated region
  $region18: #{double_conv.1} parent=0 // pred_check
    _
  $region19: #{double_conv.1} parent=0 // pred_check_branch
    %743 = sbr.rel (0) target = $region21
  $region20: #{double_conv.1} parent=0 // pred_region
    _
  $region21: #{double_conv.1} parent=0 // pred_fallthru
    _

</llo_original>
